<compile_context>
chip_gen: v5e
topology: v5e:2x2
jax: 0.10.0
libtpu: 0.0.40
codegen_flags: <defaults>
</compile_context>

<pallas_src>
import math
import functools

import jax
import jax.numpy as jnp
from jax.experimental import pallas as pl
from jax.experimental.pallas import tpu as pltpu


# ----------------------------------------------------------------------------
# Pallas kernel: one grid step == one batch element (channels-first tiles).
# Inputs (per step):
#   x1_ref  : (1, C, N)          tokens of x1 (query source), f32
#   x2_ref  : (1, C, N)          tokens of x2 (key/value source), f32
#   wq_ref  : (C8, C)            BN-folded, scale-folded query weight, bf16
#   wvk_ref : (C+C8, C)          fused BN-folded [value; key] weight, bf16
#   b_ref   : (QPAD+C+C8, 1)     fused bias column [q (scaled, padded); v; k], f32
# Output:
#   o_ref   : (1, C, N)          f32, channels-first (NCHW-compatible)
# ----------------------------------------------------------------------------
def _cross_attn_kernel(x1_ref, x2_ref, wq_ref, wvk_ref, b_ref, o_ref, *, c8, qpad):
    x1 = x1_ref[0].astype(jnp.bfloat16)      # (C, N)
    x2 = x2_ref[0].astype(jnp.bfloat16)      # (C, N)
    b = b_ref[...]                           # (QPAD + C + C8, 1) f32

    std = (((1,), (0,)), ((), ()))           # plain (M, K) @ (K, N)
    nt = (((1,), (1,)), ((), ()))            # contract last dims (transposed RHS)

    # Query projection (1/sqrt(C8) already folded in): (C8, C)@(C, N) -> (C8, N)
    q = jax.lax.dot_general(wq_ref[...], x1, std,
                            preferred_element_type=jnp.float32) + b[:c8]
    # Fused V|K projection of x2: (C+C8, C)@(C, N) -> (C+C8, N)
    vk = jax.lax.dot_general(wvk_ref[...], x2, std,
                             preferred_element_type=jnp.float32) + b[qpad:]
    v = vk[:-c8]          # (C, N)   sublane-aligned slice (starts at row 0)
    k = vk[-c8:]          # (C8, N)  sublane-aligned slice (starts at row C, C % 8 == 0)

    # energy[i, j] = <q[:, i], k[:, j]>; only the tiny (C8, N) query tile is transposed.
    qt = q.T.astype(jnp.bfloat16)                                        # (N, C8)
    energy = jax.lax.dot_general(qt, k.astype(jnp.bfloat16), std,
                                 preferred_element_type=jnp.float32)     # (N, N)

    # Numerically-stable row softmax; reciprocal on the EUP instead of a VPU divide.
    m = jnp.max(energy, axis=-1, keepdims=True)
    e = jnp.exp(energy - m)
    inv = pl.reciprocal(jnp.sum(e, axis=-1, keepdims=True), approx=True)
    attn = e * inv                                                       # (N, N) f32

    # out[c, i] = sum_j v[c, j] * attn[i, j]  -> (C, N)  == bmm(V, attn^T)
    out = jax.lax.dot_general(v.astype(jnp.bfloat16), attn.astype(jnp.bfloat16),
                              nt, preferred_element_type=jnp.float32)
    o_ref[0] = out.astype(o_ref.dtype)


# ----------------------------------------------------------------------------
# Wrapper: BN folding, weight/bias fusion, layout plumbing, pallas_call.
# ----------------------------------------------------------------------------
def _fold_bn(w, b, gamma, beta, mean, var, eps=1e-5):
    """Fold eval-mode BatchNorm into a 1x1 conv.  w: (Cout, Cin), b: (Cout,)."""
    s = gamma / jnp.sqrt(var + eps)
    return w * s[:, None], (b - mean) * s + beta


def cross_attention_layer(x1, x2, params):
    """x1, x2: (B, C, W, H) float32 NCHW (PyTorch convention). Returns same shape."""
    B, C, W, H = x1.shape
    N = W * H
    C8 = C // 8
    QPAD = ((C8 + 7) // 8) * 8          # 8-aligned rows reserved for the q-bias segment
    scale = 1.0 / math.sqrt(C8)

    # Fold BN (eval mode) into the 1x1 convs.
    wq, bq = _fold_bn(params['wq'], params['bq'], *params['bn_q'])   # (C8, C), (C8,)
    wk, bk = _fold_bn(params['wk'], params['bk'], *params['bn_k'])   # (C8, C), (C8,)
    wv, bv = _fold_bn(params['wv'], params['bv'], *params['bn_v'])   # (C,  C), (C,)

    # Fold the attention scale into the query projection; bf16 MXU weights.
    wq_s = (wq * scale).astype(jnp.bfloat16)                          # (C8, C)
    # Fuse V and K into one projection of x2 ([V; K] so both in-kernel slices are
    # sublane-aligned: V starts at row 0, K starts at row C with C % 8 == 0).
    wvk = jnp.concatenate([wv, wk], axis=0).astype(jnp.bfloat16)      # (C+C8, C)
    # One fused bias column: [scaled q bias (padded to QPAD rows); v bias; k bias].
    bq_pad = jnp.zeros((QPAD,), jnp.float32).at[:C8].set(bq * scale)
    bias = jnp.concatenate([bq_pad, bv, bk]).astype(jnp.float32)[:, None]  # (QPAD+C+C8, 1)

    # NCHW -> channels-first token matrices (B, C, N): pure reshape, no transpose.
    x1c = x1.reshape(B, C, N)
    x2c = x2.reshape(B, C, N)

    kernel = functools.partial(_cross_attn_kernel, c8=C8, qpad=QPAD)

    out = pl.pallas_call(
        kernel,
        out_shape=jax.ShapeDtypeStruct((B, C, N), jnp.float32),
        grid_spec=pltpu.PrefetchScalarGridSpec(
            num_scalar_prefetch=0,
            grid=(B,),   # one batch per step; B>=2 parallel points feed both v7x TCs
            in_specs=[
                pl.BlockSpec((1, C, N), lambda b: (b, 0, 0)),          # x1 tokens
                pl.BlockSpec((1, C, N), lambda b: (b, 0, 0)),          # x2 tokens
                pl.BlockSpec((C8, C), lambda b: (0, 0)),               # scaled Wq
                pl.BlockSpec((C + C8, C), lambda b: (0, 0)),           # fused [Wv; Wk]
                pl.BlockSpec((QPAD + C + C8, 1), lambda b: (0, 0)),    # fused biases
            ],
            out_specs=pl.BlockSpec((1, C, N), lambda b: (b, 0, 0)),
        ),
        compiler_params=pltpu.CompilerParams(
            dimension_semantics=("parallel",),
            # sized against v7x's 64 MiB physical VMEM (also valid on v5e/v6e)
            vmem_limit_bytes=48 * 1024 * 1024,
        ),
    )(x1c, x2c, wq_s, wvk, bias)

    # (B, C, N) -> NCHW is a pure reshape (output is already channels-first).
    return out.reshape(B, C, W, H)


# ----------------------------------------------------------------------------
# Pure-JAX reference (mirrors the PyTorch forward, eval-mode BN, f32 params).
# ----------------------------------------------------------------------------
def reference(x1, x2, params):
    B, C, W, H = x1.shape
    N = W * H
    C8 = C // 8
    eps = 1e-5

    def branch(x, w, b, bn):
        gamma, beta, mean, var = bn
        y = jnp.einsum('oc,bcn->bon', w, x.reshape(B, C, N)) + b[None, :, None]
        y = (y - mean[None, :, None]) / jnp.sqrt(var[None, :, None] + eps)
        return y * gamma[None, :, None] + beta[None, :, None]

    q = branch(x1, params['wq'], params['bq'], params['bn_q'])           # (B, C8, N)
    k = branch(x2, params['wk'], params['bk'], params['bn_k'])           # (B, C8, N)
    v = branch(x2, params['wv'], params['bv'], params['bn_v'])           # (B, C,  N)

    energy = jnp.einsum('bdi,bdj->bij', q, k) / math.sqrt(C8)            # (B, N, N)
    attn = jax.nn.softmax(energy, axis=-1)
    out = jnp.einsum('bcj,bij->bci', v, attn)                            # (B, C, N)
    return out.reshape(B, C, W, H)


# ----------------------------------------------------------------------------
# Deterministic parameter construction (synthetic; no checkpoint load).
# ----------------------------------------------------------------------------
def make_params(key, C):
    C8 = C // 8
    ks = jax.random.split(key, 14)
    u = lambda k, shape, s=0.2: jax.random.uniform(k, shape, jnp.float32, -s, s)

    def bn(kg, kb, km, kv, ch):
        gamma = 1.0 + u(kg, (ch,))
        beta = u(kb, (ch,))
        mean = u(km, (ch,))
        var = 0.5 + jax.random.uniform(kv, (ch,), jnp.float32, 0.0, 1.0)
        return (gamma, beta, mean, var)

    return {
        'wq': u(ks[0], (C8, C)), 'bq': u(ks[1], (C8,)),
        'wk': u(ks[2], (C8, C)), 'bk': u(ks[3], (C8,)),
        'wv': u(ks[4], (C, C)),  'bv': u(ks[5], (C,)),
        'bn_q': bn(ks[6], ks[7], ks[8], ks[9], C8),
        'bn_k': bn(ks[10], ks[11], ks[12], ks[13], C8),
        'bn_v': bn(ks[6], ks[11], ks[8], ks[13], C),
    }


if __name__ == "__main__":
    key = jax.random.PRNGKey(0)
    B, C, W, H = 2, 32, 8, 8         # channel must be divisible by 8
    k1, k2, kp = jax.random.split(key, 3)
    x1 = jax.random.normal(k1, (B, C, W, H), jnp.float32)
    x2 = jax.random.normal(k2, (B, C, W, H), jnp.float32)
    params = make_params(kp, C)

    out = cross_attention_layer(x1, x2, params)
    out = jax.block_until_ready(out)

    ref = reference(x1, x2, params)
    assert out.shape == (B, C, W, H)
    # bf16 MXU operands with f32 accumulation: errors are ~1e-3 here, well inside 1e-2.
    assert jnp.allclose(out, ref, rtol=1e-2, atol=1e-2), "mismatch vs reference"

    print("KERNEL_OK")
</pallas_src>

<mosaic_0001>
module attributes {stable_mosaic.version = 11 : i64} {
  func.func @_cross_attn_kernel(%arg0: i32, %arg1: memref<1x32x64xf32, #tpu.memory_space<vmem>>, %arg2: memref<1x32x64xf32, #tpu.memory_space<vmem>>, %arg3: memref<4x32xbf16, #tpu.memory_space<vmem>>, %arg4: memref<36x32xbf16, #tpu.memory_space<vmem>>, %arg5: memref<44x1xf32, #tpu.memory_space<vmem>>, %arg6: memref<1x32x64xf32, #tpu.memory_space<vmem>>) attributes {dimension_semantics = [#tpu.dimension_semantics<parallel>], iteration_bounds = array<i64: 2>, scalar_prefetch = 0 : i64, scratch_operands = 0 : i64, tpu.core_type = #tpu.core_type<tc>, window_params = [{transform_indices = @transform_0, window_bounds = array<i64: 1, 32, 64>}, {transform_indices = @transform_1, window_bounds = array<i64: 1, 32, 64>}, {pipeline_mode = #tpu.pipeline_mode<synchronous>, transform_indices = @transform_2, window_bounds = array<i64: 4, 32>}, {pipeline_mode = #tpu.pipeline_mode<synchronous>, transform_indices = @transform_3, window_bounds = array<i64: 36, 32>}, {pipeline_mode = #tpu.pipeline_mode<synchronous>, transform_indices = @transform_4, window_bounds = array<i64: 44, 1>}, {transform_indices = @transform_5, window_bounds = array<i64: 1, 32, 64>}]} {
    %c0 = arith.constant 0 : index
    %c0_0 = arith.constant 0 : index
    %c0_1 = arith.constant 0 : index
    %0 = vector.load %arg1[%c0, %c0_0, %c0_1] : memref<1x32x64xf32, #tpu.memory_space<vmem>>, vector<1x32x64xf32>
    %1 = vector.shape_cast %0 : vector<1x32x64xf32> to vector<32x64xf32>
    %2 = arith.truncf %1 : vector<32x64xf32> to vector<32x64xbf16>
    %c0_2 = arith.constant 0 : index
    %c0_3 = arith.constant 0 : index
    %c0_4 = arith.constant 0 : index
    %3 = vector.load %arg2[%c0_2, %c0_3, %c0_4] : memref<1x32x64xf32, #tpu.memory_space<vmem>>, vector<1x32x64xf32>
    %4 = vector.shape_cast %3 : vector<1x32x64xf32> to vector<32x64xf32>
    %5 = arith.truncf %4 : vector<32x64xf32> to vector<32x64xbf16>
    %c0_5 = arith.constant 0 : index
    %c0_6 = arith.constant 0 : index
    %6 = vector.load %arg5[%c0_5, %c0_6] : memref<44x1xf32, #tpu.memory_space<vmem>>, vector<44x1xf32>
    %c0_7 = arith.constant 0 : index
    %c0_8 = arith.constant 0 : index
    %7 = vector.load %arg3[%c0_7, %c0_8] : memref<4x32xbf16, #tpu.memory_space<vmem>>, vector<4x32xbf16>
    %cst = arith.constant dense<0.000000e+00> : vector<4x64xf32>
    %8 = tpu.matmul %7, %2, %cst {dimension_numbers = #tpu.dot_dimension_numbers<[1], [0], [0], [1], [0, 0, 1, 1], [], []>} : vector<4x32xbf16>, vector<32x64xbf16>, vector<4x64xf32> -> vector<4x64xf32>
    %9 = vector.extract_strided_slice %6 {offsets = [0, 0], sizes = [4, 1], strides = [1, 1]} : vector<44x1xf32> to vector<4x1xf32>
    %10 = vector.broadcast %9 : vector<4x1xf32> to vector<4x64xf32>
    %11 = arith.addf %8, %10 : vector<4x64xf32>
    %c0_9 = arith.constant 0 : index
    %c0_10 = arith.constant 0 : index
    %12 = vector.load %arg4[%c0_9, %c0_10] : memref<36x32xbf16, #tpu.memory_space<vmem>>, vector<36x32xbf16>
    %cst_11 = arith.constant dense<0.000000e+00> : vector<36x64xf32>
    %13 = tpu.matmul %12, %5, %cst_11 {dimension_numbers = #tpu.dot_dimension_numbers<[1], [0], [0], [1], [0, 0, 1, 1], [], []>} : vector<36x32xbf16>, vector<32x64xbf16>, vector<36x64xf32> -> vector<36x64xf32>
    %14 = vector.extract_strided_slice %6 {offsets = [8, 0], sizes = [36, 1], strides = [1, 1]} : vector<44x1xf32> to vector<36x1xf32>
    %15 = vector.broadcast %14 : vector<36x1xf32> to vector<36x64xf32>
    %16 = arith.addf %13, %15 : vector<36x64xf32>
    %17 = vector.extract_strided_slice %16 {offsets = [0, 0], sizes = [32, 64], strides = [1, 1]} : vector<36x64xf32> to vector<32x64xf32>
    %18 = vector.extract_strided_slice %16 {offsets = [32, 0], sizes = [4, 64], strides = [1, 1]} : vector<36x64xf32> to vector<4x64xf32>
    %19 = tpu.transpose %11, [1, 0] : vector<4x64xf32> -> vector<64x4xf32>
    %20 = arith.truncf %19 : vector<64x4xf32> to vector<64x4xbf16>
    %21 = arith.truncf %18 : vector<4x64xf32> to vector<4x64xbf16>
    %cst_12 = arith.constant dense<0.000000e+00> : vector<64x64xf32>
    %22 = tpu.matmul %20, %21, %cst_12 {dimension_numbers = #tpu.dot_dimension_numbers<[1], [0], [0], [1], [0, 0, 1, 1], [], []>} : vector<64x4xbf16>, vector<4x64xbf16>, vector<64x64xf32> -> vector<64x64xf32>
    %cst_13 = arith.constant dense<0xFF800000> : vector<64xf32>
    %23 = vector.multi_reduction <maximumf>, %22, %cst_13 [1] : vector<64x64xf32> to vector<64xf32>
    %24 = vector.shape_cast %23 : vector<64xf32> to vector<64x1xf32>
    %25 = vector.broadcast %24 : vector<64x1xf32> to vector<64x64xf32>
    %26 = arith.subf %22, %25 : vector<64x64xf32>
    %27 = math.exp %26 : vector<64x64xf32>
    %cst_14 = arith.constant dense<0.000000e+00> : vector<64xf32>
    %28 = vector.multi_reduction <add>, %27, %cst_14 [1] : vector<64x64xf32> to vector<64xf32>
    %29 = vector.shape_cast %28 : vector<64xf32> to vector<64x1xf32>
    %30 = tpu.reciprocal %29 {approx = true} : vector<64x1xf32> -> vector<64x1xf32>
    %31 = vector.broadcast %30 : vector<64x1xf32> to vector<64x64xf32>
    %32 = arith.mulf %27, %31 : vector<64x64xf32>
    %33 = arith.truncf %17 : vector<32x64xf32> to vector<32x64xbf16>
    %34 = arith.truncf %32 : vector<64x64xf32> to vector<64x64xbf16>
    %cst_15 = arith.constant dense<0.000000e+00> : vector<32x64xf32>
    %35 = tpu.matmul %33, %34, %cst_15 {dimension_numbers = #tpu.dot_dimension_numbers<[1], [1], [0], [0], [0, 0, 1, 0], [], []>} : vector<32x64xbf16>, vector<64x64xbf16>, vector<32x64xf32> -> vector<32x64xf32>
    %c0_16 = arith.constant 0 : index
    %c0_17 = arith.constant 0 : index
    %c0_18 = arith.constant 0 : index
    %36 = vector.load %arg6[%c0_16, %c0_17, %c0_18] : memref<1x32x64xf32, #tpu.memory_space<vmem>>, vector<1x32x64xf32>
    %37 = vector.shape_cast %36 : vector<1x32x64xf32> to vector<32x64xf32>
    %38 = vector.shape_cast %35 : vector<32x64xf32> to vector<1x32x64xf32>
    tpu.vector_store %arg6[%c0_16, %c0_17, %c0_18], %38 {strides = array<i32>} : memref<1x32x64xf32, #tpu.memory_space<vmem>>, vector<1x32x64xf32>,
    return
  }
  func.func @transform_0(%arg0: i32) -> (i32, i32, i32) {
    %c0_i32 = arith.constant 0 : i32
    %c0_i32_0 = arith.constant 0 : i32
    %c0_i32_1 = arith.constant 0 : i32
    return %arg0, %c0_i32, %c0_i32_0 : i32, i32, i32
  }
  func.func @transform_1(%arg0: i32) -> (i32, i32, i32) {
    %c0_i32 = arith.constant 0 : i32
    %c0_i32_0 = arith.constant 0 : i32
    %c0_i32_1 = arith.constant 0 : i32
    return %arg0, %c0_i32, %c0_i32_0 : i32, i32, i32
  }
  func.func @transform_2(%arg0: i32) -> (i32, i32) {
    %c0_i32 = arith.constant 0 : i32
    %c0_i32_0 = arith.constant 0 : i32
    %c0_i32_1 = arith.constant 0 : i32
    return %c0_i32, %c0_i32_0 : i32, i32
  }
  func.func @transform_3(%arg0: i32) -> (i32, i32) {
    %c0_i32 = arith.constant 0 : i32
    %c0_i32_0 = arith.constant 0 : i32
    %c0_i32_1 = arith.constant 0 : i32
    return %c0_i32, %c0_i32_0 : i32, i32
  }
  func.func @transform_4(%arg0: i32) -> (i32, i32) {
    %c0_i32 = arith.constant 0 : i32
    %c0_i32_0 = arith.constant 0 : i32
    %c0_i32_1 = arith.constant 0 : i32
    return %c0_i32, %c0_i32_0 : i32, i32
  }
  func.func @transform_5(%arg0: i32) -> (i32, i32, i32) {
    %c0_i32 = arith.constant 0 : i32
    %c0_i32_0 = arith.constant 0 : i32
    %c0_i32_1 = arith.constant 0 : i32
    return %arg0, %c0_i32, %c0_i32_0 : i32, i32, i32
  }
}

</mosaic_0001>

<llo_original>
// kernel: tpu_custom_call.1
$region0: #{tpu_custom_call.1}
  #allocation0 [shape = 'u32[]', space=smem, size = 0x4, offset = 0x4, fixed_abs, tag = 'smem constant byte address 0x4 - core index']
  #allocation1 [shape = 'u32[72,128]{1,0:T(1,128)}', space=vmem, size = 0x9000, scoped, tag = 'internal scratch']
  %s0 = inlined_call_operand.vmem [shape: f32[2,32,64], index: 0, kind: input, shape index: {}]
  %s1 = inlined_call_operand.hbm [shape: f32[2,32,64], index: 1, kind: input, shape index: {}]
  %s2 = inlined_call_operand.vmem [shape: bf16[4,32], index: 2, kind: input, shape index: {}]
  %s3 = inlined_call_operand.vmem [shape: bf16[36,32], index: 3, kind: input, shape index: {}]
  %s4 = inlined_call_operand.vmem [shape: f32[44,1], index: 4, kind: input, shape index: {}]
  %s5 = inlined_call_operand.hbm [shape: f32[2,32,64], index: 5, kind: output, shape index: {}]
  %s6 = sld [smem:[#allocation0]]
  $region57: #{tpu_custom_call.1} parent=0
    _
  %s8 = ssub.s32 1, %s6
  %s9 = scalar_select 0, %s8, %s6
  $region1: #{tpu_custom_call.1} parent=0
    #allocation2 [shape = 'u8[32768]{0}', space=vmem, size = 0x8000, scoped, tag = 'input window, operand 1']
    #allocation3 [shape = 's32[2]{0}', space=sflag, size = 0x8, scoped, tag = 'scoped memory for tpu_custom_call.1']
    #allocation4 [shape = 's32[2]{0}', space=sflag, size = 0x8, scoped, tag = 'scoped memory for tpu_custom_call.1']
    #allocation5 [shape = 'u8[32768]{0}', space=vmem, size = 0x8000, scoped, tag = 'output window, operand 0']
    %10 = vsyncpa [#allocation3], 0
    %s11 = scalar_lea.sflag [#allocation3], 1
    %12 = vsyncpa %s11, 0
    %13 = vsyncpa [#allocation4], 0
    %s14 = scalar_lea.sflag [#allocation4], 1
    %15 = vsyncpa %s14, 0
    loop: start=0, step=1, limit=4
    $region2: #{tpu_custom_call.1} parent=1 // loop_pre_header
      _
    $region3: #{tpu_custom_call.1} parent=1 // loop_header
      %s17 = sphi 0, %s21
      %p18 = scmp.ge.s32.totalorder %s17, 4
      %s27 = sphi 0, %s29
      %s30 = sphi 0, %s27
      %s31 = sphi 0, %s30
      %s47 = sphi 0, %s31
      %s53 = sphi 0, %s55
      %s56 = sphi 0, %s53
      %s57 = sphi 0, %s56
      %s73 = sphi 0, %s57
      %s77 = sphi 0, %s77
      %s79 = sphi 0, %s77
      %s80 = sphi 0, %s79
      %s94 = sphi 0, %s80
      %s98 = sphi 0, %s98
      %s100 = sphi 0, %s98
      %s101 = sphi 0, %s100
      %s115 = sphi 0, %s101
      %s119 = sphi 0, %s119
      %s121 = sphi 0, %s119
      %s122 = sphi 0, %s121
      %s136 = sphi 0, %s122
      %s142 = sphi 0, %s144
      %s145 = sphi 0, %s142
      %s146 = sphi 0, %s145
      %s162 = sphi 0, %s146
    $region4: #{tpu_custom_call.1} parent=1 // loop_header_branch
      %20 = sbr.rel (%p18) target = $region8
    $region5: #{tpu_custom_call.1} parent=1 // loop_body
      %s22 = ssub.s32 %s17, 1
      %s23 = ssub.s32 %s17, 2
      %s24 = sadd.s32 %s17, 1
      %s25 = ssub.s32 %s17, %s24
      %p26 = scmp.eq.s32.totalorder %s25, 0
      %s28 = sadd.s32 %s27, 1
      %s29 = scalar_select %p26, %s27, %s28
      %p32 = pneg %p26
      %p33 = scmp.eq.s32.totalorder %s17, 1
      %p34 = por %p32, %p33
      %p35 = scmp.ne.s32.totalorder %s27, %s30
      %p36 = scmp.eq.s32.totalorder %s17, 0
      %p37 = por %p35, %p36
      %p38 = scmp.ne.s32.totalorder %s27, %s30
      %p39 = scmp.eq.s32.totalorder %s22, 1
      %p40 = por %p38, %p39
      %p41 = scmp.ne.s32.totalorder %s30, %s31
      %p42 = scmp.eq.s32.totalorder %s22, 0
      %p43 = por %p41, %p42
      %p44 = scmp.ne.s32.totalorder %s30, %s31
      %p45 = scmp.eq.s32.totalorder %s23, 1
      %p46 = por %p44, %p45
      %p48 = scmp.ne.s32.totalorder %s31, %s47
      %p49 = scmp.eq.s32.totalorder %s23, 0
      %p50 = por %p48, %p49
      %s51 = ssub.s32 %s17, %s24
      %p52 = scmp.eq.s32.totalorder %s51, 0
      %s54 = sadd.s32 %s53, 1
      %s55 = scalar_select %p52, %s53, %s54
      %p58 = pneg %p52
      %p59 = scmp.eq.s32.totalorder %s17, 1
      %p60 = por %p58, %p59
      %p61 = scmp.ne.s32.totalorder %s53, %s56
      %p62 = scmp.eq.s32.totalorder %s17, 0
      %p63 = por %p61, %p62
      %p64 = scmp.ne.s32.totalorder %s53, %s56
      %p65 = scmp.eq.s32.totalorder %s22, 1
      %p66 = por %p64, %p65
      %p67 = scmp.ne.s32.totalorder %s56, %s57
      %p68 = scmp.eq.s32.totalorder %s22, 0
      %p69 = por %p67, %p68
      %p70 = scmp.ne.s32.totalorder %s56, %s57
      %p71 = scmp.eq.s32.totalorder %s23, 1
      %p72 = por %p70, %p71
      %p74 = scmp.ne.s32.totalorder %s57, %s73
      %p75 = scmp.eq.s32.totalorder %s23, 0
      %p76 = por %p74, %p75
      %s78 = sadd.s32 %s77, 1
      %p81 = scmp.eq.s32.totalorder %s17, 1
      %p82 = scmp.ne.s32.totalorder %s77, %s79
      %p83 = scmp.eq.s32.totalorder %s17, 0
      %p84 = por %p82, %p83
      %p85 = scmp.ne.s32.totalorder %s77, %s79
      %p86 = scmp.eq.s32.totalorder %s22, 1
      %p87 = por %p85, %p86
      %p88 = scmp.ne.s32.totalorder %s79, %s80
      %p89 = scmp.eq.s32.totalorder %s22, 0
      %p90 = por %p88, %p89
      %p91 = scmp.ne.s32.totalorder %s79, %s80
      %p92 = scmp.eq.s32.totalorder %s23, 1
      %p93 = por %p91, %p92
      %p95 = scmp.ne.s32.totalorder %s80, %s94
      %p96 = scmp.eq.s32.totalorder %s23, 0
      %p97 = por %p95, %p96
      %s99 = sadd.s32 %s98, 1
      %p102 = scmp.eq.s32.totalorder %s17, 1
      %p103 = scmp.ne.s32.totalorder %s98, %s100
      %p104 = scmp.eq.s32.totalorder %s17, 0
      %p105 = por %p103, %p104
      %p106 = scmp.ne.s32.totalorder %s98, %s100
      %p107 = scmp.eq.s32.totalorder %s22, 1
      %p108 = por %p106, %p107
      %p109 = scmp.ne.s32.totalorder %s100, %s101
      %p110 = scmp.eq.s32.totalorder %s22, 0
      %p111 = por %p109, %p110
      %p112 = scmp.ne.s32.totalorder %s100, %s101
      %p113 = scmp.eq.s32.totalorder %s23, 1
      %p114 = por %p112, %p113
      %p116 = scmp.ne.s32.totalorder %s101, %s115
      %p117 = scmp.eq.s32.totalorder %s23, 0
      %p118 = por %p116, %p117
      %s120 = sadd.s32 %s119, 1
      %p123 = scmp.eq.s32.totalorder %s17, 1
      %p124 = scmp.ne.s32.totalorder %s119, %s121
      %p125 = scmp.eq.s32.totalorder %s17, 0
      %p126 = por %p124, %p125
      %p127 = scmp.ne.s32.totalorder %s119, %s121
      %p128 = scmp.eq.s32.totalorder %s22, 1
      %p129 = por %p127, %p128
      %p130 = scmp.ne.s32.totalorder %s121, %s122
      %p131 = scmp.eq.s32.totalorder %s22, 0
      %p132 = por %p130, %p131
      %p133 = scmp.ne.s32.totalorder %s121, %s122
      %p134 = scmp.eq.s32.totalorder %s23, 1
      %p135 = por %p133, %p134
      %p137 = scmp.ne.s32.totalorder %s122, %s136
      %p138 = scmp.eq.s32.totalorder %s23, 0
      %p139 = por %p137, %p138
      %s140 = ssub.s32 %s17, %s24
      %p141 = scmp.eq.s32.totalorder %s140, 0
      %s143 = sadd.s32 %s142, 1
      %s144 = scalar_select %p141, %s142, %s143
      %p147 = pneg %p141
      %p148 = scmp.eq.s32.totalorder %s17, 1
      %p149 = por %p147, %p148
      %p150 = scmp.ne.s32.totalorder %s142, %s145
      %p151 = scmp.eq.s32.totalorder %s17, 0
      %p152 = por %p150, %p151
      %p153 = scmp.ne.s32.totalorder %s142, %s145
      %p154 = scmp.eq.s32.totalorder %s22, 1
      %p155 = por %p153, %p154
      %p156 = scmp.ne.s32.totalorder %s145, %s146
      %p157 = scmp.eq.s32.totalorder %s22, 0
      %p158 = por %p156, %p157
      %p159 = scmp.ne.s32.totalorder %s145, %s146
      %p160 = scmp.eq.s32.totalorder %s23, 1
      %p161 = por %p159, %p160
      %p163 = scmp.ne.s32.totalorder %s146, %s162
      %p164 = scmp.eq.s32.totalorder %s23, 0
      %p165 = por %p163, %p164
      %p166 = scmp.le.s32.totalorder 1, %s17
      %p167 = scmp.lt.s32.totalorder %s17, 3
      %p168 = pnand %p166, %p167
      %p169 = pneg %p168
      // Predicated region
      $region9: #{tpu_custom_call.1} parent=5 // pred_check
        _
      $region10: #{tpu_custom_call.1} parent=5 // pred_check_branch
        %171 = sbr.rel (%p168) target = $region12
      $region11: #{tpu_custom_call.1} parent=5 // pred_region
        %s172 = ssub.s32 %s17, 1
        // Predicated region
        $region13: #{tpu_custom_call.1} parent=11 // pred_check
          %p173 = pneg %p90
        $region14: #{tpu_custom_call.1} parent=11 // pred_check_branch
          %175 = sbr.rel (%p173) target = $region16
        $region15: #{tpu_custom_call.1} parent=11 // pred_region
          _
        $region16: #{tpu_custom_call.1} parent=11 // pred_fallthru
          _
        // Predicated region
        $region17: #{tpu_custom_call.1} parent=11 // pred_check
          %p176 = pneg %p111
        $region18: #{tpu_custom_call.1} parent=11 // pred_check_branch
          %178 = sbr.rel (%p176) target = $region20
        $region19: #{tpu_custom_call.1} parent=11 // pred_region
          _
        $region20: #{tpu_custom_call.1} parent=11 // pred_fallthru
          _
        // Predicated region
        $region21: #{tpu_custom_call.1} parent=11 // pred_check
          %p179 = pneg %p132
        $region22: #{tpu_custom_call.1} parent=11 // pred_check_branch
          %181 = sbr.rel (%p179) target = $region24
        $region23: #{tpu_custom_call.1} parent=11 // pred_region
          _
        $region24: #{tpu_custom_call.1} parent=11 // pred_fallthru
          _
      $region12: #{tpu_custom_call.1} parent=5 // pred_fallthru
        _
      %p182 = scmp.lt.s32.totalorder %s17, 2
      // Predicated region
      $region25: #{tpu_custom_call.1} parent=5 // pred_check
        %p183 = pneg %p182
      $region26: #{tpu_custom_call.1} parent=5 // pred_check_branch
        %185 = sbr.rel (%p183) target = $region28
      $region27: #{tpu_custom_call.1} parent=5 // pred_region
        // Predicated region
        $region29: #{tpu_custom_call.1} parent=27 // pred_check
          %p186 = pneg %p37
        $region30: #{tpu_custom_call.1} parent=27 // pred_check_branch
          %188 = sbr.rel (%p186) target = $region32
        $region31: #{tpu_custom_call.1} parent=27 // pred_region
          %p189 = scmp.lt.s32.totalorder %s17, 1
          %s190 = scalar_select %p189, %s17, 1
          %s191 = smul.addr %s190, 4
          %s192 = smul.addr %s191, 8
          %s193 = scalar_lea.vmem %s0, %s192
        $region32: #{tpu_custom_call.1} parent=27 // pred_fallthru
          _
        // Predicated region
        $region33: #{tpu_custom_call.1} parent=27 // pred_check
          %p194 = pneg %p63
        $region34: #{tpu_custom_call.1} parent=27 // pred_check_branch
          %196 = sbr.rel (%p194) target = $region36
        $region35: #{tpu_custom_call.1} parent=27 // pred_region
          %s197 = sand.u32 %s53, 1
          %s198 = scalar_lea.sflag [#allocation3], %s197
          %s199 = sand.u32 %s53, 1
          %s200 = smul.addr %s199, 32
          %s201 = scalar_lea.vmem [#allocation2], %s200
          %203 = vsyncadd %s198, 0
          %s204 = smul.addr %s17, 4
          %s205 = smul.addr %s204, 8
          %s206 = scalar_lea.hbm %s1, %s205
          %s207 = sshll.u32 %s206, 4
          %s208 = int_to_ptr.hbm [resolvable:$true] %s207
          %s209 = sshll.u32 %s201, 4
          %s210 = int_to_ptr.vmem [resolvable:$true] %s209
          %215 = dma.hbm_to_vmem [thread:$0]  %s208, 512, %s210, %s198, 128, 128, 8
        $region36: #{tpu_custom_call.1} parent=27 // pred_fallthru
          _
      $region28: #{tpu_custom_call.1} parent=5 // pred_fallthru
        _
      %p216 = scmp.le.s32.totalorder 1, %s17
      %p217 = scmp.lt.s32.totalorder %s17, 3
      %p218 = pnand %p216, %p217
      %p219 = pneg %p218
      // Predicated region
      $region37: #{tpu_custom_call.1} parent=5 // pred_check
        _
      $region38: #{tpu_custom_call.1} parent=5 // pred_check_branch
        %221 = sbr.rel (%p218) target = $region40
      $region39: #{tpu_custom_call.1} parent=5 // pred_region
        %s222 = ssub.s32 %s17, 1
        %s223 = sand.u32 %s56, 1
        %s224 = scalar_lea.sflag [#allocation3], %s223
        %s225 = sand.u32 %s56, 1
        %s226 = smul.addr %s225, 32
        %s227 = scalar_lea.vmem [#allocation2], %s226
        // Predicated region
        $region41: #{tpu_custom_call.1} parent=39 // pred_check
          %p228 = pneg %p69
        $region42: #{tpu_custom_call.1} parent=39 // pred_check_branch
          %230 = sbr.rel (%p228) target = $region44
        $region43: #{tpu_custom_call.1} parent=39 // pred_region
          %232 = dma.done %s224, 512
        $region44: #{tpu_custom_call.1} parent=39 // pred_fallthru
          _
        %p233 = scmp.lt.s32.totalorder %s22, 1
        %s234 = scalar_select %p233, %s22, 1
        %s235 = smul.addr %s234, 4
        %s236 = smul.addr %s235, 8
        %s237 = scalar_lea.vmem %s0, %s236
        %p238 = pneg %p43
        %p239 = pneg %p40
        %s240 = sand.u32 %s56, 1
        %s241 = scalar_lea.sflag [#allocation3], %s240
        %s242 = sand.u32 %s56, 1
        %s243 = smul.addr %s242, 32
        %s244 = scalar_lea.vmem [#allocation2], %s243
        %p245 = pneg %p69
        %p246 = pneg %p66
        %p247 = pneg %p90
        %p248 = pneg %p87
        %p249 = pneg %p111
        %p250 = pneg %p108
        %p251 = pneg %p132
        %p252 = pneg %p129
        %p253 = pneg %p158
        %p254 = pneg %p155
        %s255 = sand.u32 %s145, 1
        %s256 = scalar_lea.sflag [#allocation4], %s255
        %s257 = sand.u32 %s145, 1
        %s258 = smul.addr %s257, 32
        %s259 = scalar_lea.vmem [#allocation5], %s258
        %p260 = scmp.lt.s32.totalorder %s22, 1
        %s261 = scalar_select %p260, %s22, 1
        %s262 = smul.addr %s261, 4
        %s263 = smul.addr %s262, 8
        %s264 = scalar_lea.vmem %s0, %s263
        %v266 = vld [vmem:[%s264] sm:$0xff]
        %v267 = vld [vmem:[%s264 + $0x8] sm:$0xff]
        %v268 = vld [vmem:[%s264 + $0x10] sm:$0xff]
        %v269 = vld [vmem:[%s264 + $0x18] sm:$0xff]
        %v270 = vpack.c.bf16 %v267, %v266
        %v271 = vpack.c.bf16 %v269, %v268
        %v272 = vld [vmem:[%s227] sm:$0xff]
        %v273 = vld [vmem:[%s227 + $0x8] sm:$0xff]
        %v274 = vld [vmem:[%s227 + $0x10] sm:$0xff]
        %v275 = vld [vmem:[%s227 + $0x18] sm:$0xff]
        %v276 = vpack.c.bf16 %v273, %v272
        %v277 = vpack.c.bf16 %v275, %v274
        %v278 = vld [vmem:[%s4] sm:$0xff]
        %v279 = vld [vmem:[%s4 + $0x8] sm:$0xff]
        %v280 = vld [vmem:[%s4 + $0x10] sm:$0xff]
        %v281 = vld [vmem:[%s4 + $0x18] sm:$0xff]
        %v282 = vld [vmem:[%s4 + $0x20] sm:$0xff]
        %v283 = vld [vmem:[%s4 + $0x28] sm:$0xf]
        %v284 = vld [vmem:[%s2] sm:$0x3]
        %286 = vset.pattern.permute.xlu0 0
        %287 = vperm.xlu0 %286, %v278
        %v288 = vpop.permute.xlu0 %287
        %vm290 = vcmask 261120
        %v292 = vsel %vm290, %v284, 0
        %294 = vmatpush.bf16.msra.mxu0 0
        %295 = vmatpush.bf16.msra.mxu0 0
        %296 = vmatpush.bf16.msra.mxu0 0
        %297 = vmatpush.bf16.msra.mxu0 0
        %298 = vmatpush.bf16.msra.mxu0 0
        %299 = vmatpush.bf16.msra.mxu0 0
        %300 = vmatpush.bf16.msra.mxu0 %v271
        %301 = vmatpush.bf16.msra.mxu0 %v270
        %302 = vmatmul.bf16.gmra.mxu0 %v292
        %v303 = vpop.f32.mrf.mxu0
        %v304 = vadd.f32 %v288, %v303
        %v305 = vpop.f32.mrf.mxu0
        %306 = vdwg.mxu0
        %v307 = vld [vmem:[%s3] sm:$0xf]
        %v308 = vld [vmem:[%s3 + $0x4] sm:$0xf]
        %v309 = vld [vmem:[%s3 + $0x8] sm:$0xf]
        %v310 = vld [vmem:[%s3 + $0xc] sm:$0xf]
        %v311 = vld [vmem:[%s3 + $0x10] sm:$0x3]
        %313 = vset.pattern.permute.xlu0 0
        %314 = vperm.xlu0 %313, %v279
        %v315 = vpop.permute.xlu0 %314
        %318 = vset.pattern.permute.xlu0 0
        %319 = vperm.xlu0 %318, %v280
        %v320 = vpop.permute.xlu0 %319
        %323 = vset.pattern.permute.xlu0 0
        %324 = vperm.xlu0 %323, %v281
        %v325 = vpop.permute.xlu0 %324
        %328 = vset.pattern.permute.xlu0 0
        %329 = vperm.xlu0 %328, %v282
        %v330 = vpop.permute.xlu0 %329
        %333 = vset.pattern.permute.xlu0 0
        %334 = vperm.xlu0 %333, %v283
        %v335 = vpop.permute.xlu0 %334
        %v342 = vunpack.c.l.b16 %v307
        %v343 = vunpack.c.l.b16 %v308
        %v344 = vunpack.c.l.b16 %v309
        %v345 = vunpack.c.l.b16 %v310
        %v346 = vunpack.c.l.b16 %v311
        %v347 = vpack.c.b16 %v343, %v342
        %v348 = vpack.c.b16 %v345, %v344
        %v349 = vpack.c.b16 %v346, %v346
        %v351 = vsel %vm290, %v347, 0
        %v354 = vsel %vm290, %v348, 0
        %v357 = vsel %vm290, %v349, 0
        %359 = vmatpush.bf16.msra.mxu0 0
        %360 = vmatpush.bf16.msra.mxu0 0
        %361 = vmatpush.bf16.msra.mxu0 0
        %362 = vmatpush.bf16.msra.mxu0 0
        %363 = vmatpush.bf16.msra.mxu0 0
        %364 = vmatpush.bf16.msra.mxu0 0
        %365 = vmatpush.bf16.msra.mxu0 %v277
        %366 = vmatpush.bf16.msra.mxu0 %v276
        %367 = vmatmul.bf16.gmra.mxu0 %v351
        %v368 = vpop.f32.mrf.mxu0
        %v369 = vadd.f32 %v315, %v368
        %v370 = vpop.f32.mrf.mxu0
        %v371 = vadd.f32 %v320, %v370
        %372 = vmatmul.bf16.gmra.mxu0 %v354
        %v373 = vpop.f32.mrf.mxu0
        %v374 = vadd.f32 %v325, %v373
        %v375 = vpop.f32.mrf.mxu0
        %v376 = vadd.f32 %v330, %v375
        %377 = vmatmul.bf16.gmra.mxu0 %v357
        %v378 = vpop.f32.mrf.mxu0
        %v379 = vadd.f32 %v335, %v378
        %v380 = vpop.f32.mrf.mxu0
        %381 = vdwg.mxu0
        %382 = vxpose.xlu0.b32.start [1/16] %v304, 128
        %383 = vxpose.xlu0.b32.cont [2/16] 0.0, 128
        %384 = vxpose.xlu0.b32.cont [3/16] 0.0, 128
        %385 = vxpose.xlu0.b32.cont [4/16] 0.0, 128
        %386 = vxpose.xlu0.b32.cont [5/16] 0.0, 128
        %387 = vxpose.xlu0.b32.cont [6/16] 0.0, 128
        %388 = vxpose.xlu0.b32.cont [7/16] 0.0, 128
        %389 = vxpose.xlu0.b32.cont [8/16] 0.0, 128
        %390 = vxpose.xlu0.b32.cont [9/16] 0.0, 128
        %391 = vxpose.xlu0.b32.cont [10/16] 0.0, 128
        %392 = vxpose.xlu0.b32.cont [11/16] 0.0, 128
        %393 = vxpose.xlu0.b32.cont [12/16] 0.0, 128
        %394 = vxpose.xlu0.b32.cont [13/16] 0.0, 128
        %395 = vxpose.xlu0.b32.cont [14/16] 0.0, 128
        %396 = vxpose.xlu0.b32.cont [15/16] 0.0, 128
        %397 = vxpose.xlu0.b32.end [16/16] 0.0, 128
        %v398 = vpop.trf.xlu0
        %v399 = vpop.trf.xlu0
        %v400 = vpop.trf.xlu0
        %v401 = vpop.trf.xlu0
        %v402 = vpop.trf.xlu0
        %v403 = vpop.trf.xlu0
        %v404 = vpop.trf.xlu0
        %v405 = vpop.trf.xlu0
        %v406 = vpop.trf.xlu0
        %v407 = vpop.trf.xlu0
        %v408 = vpop.trf.xlu0
        %v409 = vpop.trf.xlu0
        %v410 = vpop.trf.xlu0
        %v411 = vpop.trf.xlu0
        %v412 = vpop.trf.xlu0
        %v413 = vpop.trf.xlu0
        %v414 = vpack.c.bf16 %v399, %v398
        %v415 = vpack.c.bf16 %v401, %v400
        %v416 = vpack.c.bf16 %v403, %v402
        %v417 = vpack.c.bf16 %v405, %v404
        %v418 = vpack.c.bf16 %v379, %v379
        %vm419 = vcmask 31744
        %v421 = vsel %vm419, %v414, 0
        %v424 = vsel %vm419, %v415, 0
        %v427 = vsel %vm419, %v416, 0
        %v430 = vsel %vm419, %v417, 0
        %vm432 = vcmask 1041408
        %v434 = vsel %vm432, %v418, 0
        %436 = vmatpush.bf16.msra.mxu0 0
        %437 = vmatpush.bf16.msra.mxu0 0
        %438 = vmatpush.bf16.msra.mxu0 0
        %439 = vmatpush.bf16.msra.mxu0 0
        %440 = vmatpush.bf16.msra.mxu0 0
        %441 = vmatpush.bf16.msra.mxu0 0
        %442 = vmatpush.bf16.msra.mxu0 0
        %443 = vmatpush.bf16.msra.mxu0 %v434
        %444 = vmatmul.bf16.gmra.mxu0 %v421
        %v445 = vpop.f32.mrf.mxu0
        %v446 = vadd.f32 0.0, %v445
        %v447 = vpop.f32.mrf.mxu0
        %v448 = vadd.f32 0.0, %v447
        %449 = vmatmul.bf16.gmra.mxu0 %v424
        %v450 = vpop.f32.mrf.mxu0
        %v451 = vadd.f32 0.0, %v450
        %v452 = vpop.f32.mrf.mxu0
        %v453 = vadd.f32 0.0, %v452
        %454 = vmatmul.bf16.gmra.mxu0 %v427
        %v455 = vpop.f32.mrf.mxu0
        %v456 = vadd.f32 0.0, %v455
        %v457 = vpop.f32.mrf.mxu0
        %v458 = vadd.f32 0.0, %v457
        %459 = vmatmul.bf16.gmra.mxu0 %v430
        %v460 = vpop.f32.mrf.mxu0
        %v461 = vadd.f32 0.0, %v460
        %v462 = vpop.f32.mrf.mxu0
        %v463 = vadd.f32 0.0, %v462
        %464 = vdwg.mxu0
        %vm465 = vcmask 523264
        %v466 = vsel %vm465, %v446, -inf
        %467 = vmax.xlane.f32.xlu0 %v466
        %v468 = vpop.xlane.xlu0 %467
        %v469 = vsel %vm465, %v448, -inf
        %470 = vmax.xlane.f32.xlu0 %v469
        %v471 = vpop.xlane.xlu0 %470
        %v472 = vsel %vm465, %v451, -inf
        %473 = vmax.xlane.f32.xlu0 %v472
        %v474 = vpop.xlane.xlu0 %473
        %v475 = vsel %vm465, %v453, -inf
        %476 = vmax.xlane.f32.xlu0 %v475
        %v477 = vpop.xlane.xlu0 %476
        %v478 = vsel %vm465, %v456, -inf
        %479 = vmax.xlane.f32.xlu0 %v478
        %v480 = vpop.xlane.xlu0 %479
        %v481 = vsel %vm465, %v458, -inf
        %482 = vmax.xlane.f32.xlu0 %v481
        %v483 = vpop.xlane.xlu0 %482
        %v484 = vsel %vm465, %v461, -inf
        %485 = vmax.xlane.f32.xlu0 %v484
        %v486 = vpop.xlane.xlu0 %485
        %v487 = vsel %vm465, %v463, -inf
        %488 = vmax.xlane.f32.xlu0 %v487
        %v489 = vpop.xlane.xlu0 %488
        %v490 = vsub.f32 %v446, %v468
        %v491 = vsub.f32 %v448, %v471
        %v492 = vsub.f32 %v451, %v474
        %v493 = vsub.f32 %v453, %v477
        %v494 = vsub.f32 %v456, %v480
        %v495 = vsub.f32 %v458, %v483
        %v496 = vsub.f32 %v461, %v486
        %v497 = vsub.f32 %v463, %v489
        %v498 = vmul.f32 %v490, 1.442695
        %v499 = vpow.pop %v498
        %v500 = vmul.f32 %v491, 1.442695
        %v501 = vpow.pop %v500
        %v502 = vmul.f32 %v492, 1.442695
        %v503 = vpow.pop %v502
        %v504 = vmul.f32 %v493, 1.442695
        %v505 = vpow.pop %v504
        %v506 = vmul.f32 %v494, 1.442695
        %v507 = vpow.pop %v506
        %v508 = vmul.f32 %v495, 1.442695
        %v509 = vpow.pop %v508
        %v510 = vmul.f32 %v496, 1.442695
        %v511 = vpow.pop %v510
        %v512 = vmul.f32 %v497, 1.442695
        %v513 = vpow.pop %v512
        %v514 = vsel %vm465, %v499, 0.0
        %515 = vadd.xlane.f32.xlu0 %v514
        %v516 = vpop.xlane.xlu0 %515
        %v517 = vsel %vm465, %v501, 0.0
        %518 = vadd.xlane.f32.xlu0 %v517
        %v519 = vpop.xlane.xlu0 %518
        %v520 = vsel %vm465, %v503, 0.0
        %521 = vadd.xlane.f32.xlu0 %v520
        %v522 = vpop.xlane.xlu0 %521
        %v523 = vsel %vm465, %v505, 0.0
        %524 = vadd.xlane.f32.xlu0 %v523
        %v525 = vpop.xlane.xlu0 %524
        %v526 = vsel %vm465, %v507, 0.0
        %527 = vadd.xlane.f32.xlu0 %v526
        %v528 = vpop.xlane.xlu0 %527
        %v529 = vsel %vm465, %v509, 0.0
        %530 = vadd.xlane.f32.xlu0 %v529
        %v531 = vpop.xlane.xlu0 %530
        %v532 = vsel %vm465, %v511, 0.0
        %533 = vadd.xlane.f32.xlu0 %v532
        %v534 = vpop.xlane.xlu0 %533
        %v535 = vsel %vm465, %v513, 0.0
        %536 = vadd.xlane.f32.xlu0 %v535
        %v537 = vpop.xlane.xlu0 %536
        %v538 = vrcp.pop %v516
        %v539 = vrcp.pop %v519
        %v540 = vrcp.pop %v522
        %v541 = vrcp.pop %v525
        %v542 = vrcp.pop %v528
        %v543 = vrcp.pop %v531
        %v544 = vrcp.pop %v534
        %v545 = vrcp.pop %v537
        %v546 = vmul.f32 %v499, %v538
        %v547 = vmul.f32 %v501, %v539
        %v548 = vmul.f32 %v503, %v540
        %v549 = vmul.f32 %v505, %v541
        %v550 = vmul.f32 %v507, %v542
        %v551 = vmul.f32 %v509, %v543
        %v552 = vmul.f32 %v511, %v544
        %v553 = vmul.f32 %v513, %v545
        %v554 = vpack.c.bf16 %v371, %v369
        %v555 = vpack.c.bf16 %v376, %v374
        %v556 = vpack.c.bf16 %v547, %v546
        %v557 = vpack.c.bf16 %v549, %v548
        %v558 = vpack.c.bf16 %v551, %v550
        %v559 = vpack.c.bf16 %v553, %v552
        %v561 = vsel %vm465, %v554, 0
        %v564 = vsel %vm465, %v555, 0
        %v567 = vsel %vm465, %v556, 0
        %v570 = vsel %vm465, %v557, 0
        %v573 = vsel %vm465, %v558, 0
        %v576 = vsel %vm465, %v559, 0
        %578 = vmatpush.bf16.xpose.msra.mxu0 0
        %579 = vmatpush.bf16.xpose.msra.mxu0 0
        %580 = vmatpush.bf16.xpose.msra.mxu0 0
        %581 = vmatpush.bf16.xpose.msra.mxu0 0
        %582 = vmatpush.bf16.xpose.msra.mxu0 %v576
        %583 = vmatpush.bf16.xpose.msra.mxu0 %v573
        %584 = vmatpush.bf16.xpose.msra.mxu0 %v570
        %585 = vmatpush.bf16.xpose.msra.mxu0 %v567
        %586 = vmatmul.bf16.gmra.mxu0 %v561
        %v587 = vpop.f32.mrf.mxu0
        %v588 = vadd.f32 0.0, %v587
        %v589 = vpop.f32.mrf.mxu0
        %v590 = vadd.f32 0.0, %v589
        %591 = vmatmul.bf16.gmra.mxu0 %v564
        %v592 = vpop.f32.mrf.mxu0
        %v593 = vadd.f32 0.0, %v592
        %v594 = vpop.f32.mrf.mxu0
        %v595 = vadd.f32 0.0, %v594
        %596 = vdwg.mxu0
        %597 = vst.msk [vmem:[%s259] sm:$0xff] %vm465, %v588
        %598 = vst.msk [vmem:[%s259 + $0x8] sm:$0xff] %vm465, %v590
        %599 = vst.msk [vmem:[%s259 + $0x10] sm:$0xff] %vm465, %v593
        %600 = vst.msk [vmem:[%s259 + $0x18] sm:$0xff] %vm465, %v595
        %s601 = sand.u32 %s145, 1
        %s602 = scalar_lea.sflag [#allocation4], %s601
        %s603 = sand.u32 %s145, 1
        %s604 = smul.addr %s603, 32
        %s605 = scalar_lea.vmem [#allocation5], %s604
        // Predicated region
        $region45: #{tpu_custom_call.1} parent=39 // pred_check
          %p606 = pneg %p155
        $region46: #{tpu_custom_call.1} parent=39 // pred_check_branch
          %608 = sbr.rel (%p606) target = $region48
        $region47: #{tpu_custom_call.1} parent=39 // pred_region
          %610 = vsyncadd %s602, 0
          %s611 = smul.addr %s22, 4
          %s612 = smul.addr %s611, 8
          %s613 = scalar_lea.hbm %s5, %s612
          %s614 = sshll.u32 %s605, 4
          %s615 = int_to_ptr.vmem [resolvable:$true] %s614
          %s616 = sshll.u32 %s613, 4
          %s617 = int_to_ptr.hbm [resolvable:$true] %s616
          %622 = dma.vmem_to_hbm [thread:$0]  %s615, 512, %s617, %s602, 128, 128, 8
        $region48: #{tpu_custom_call.1} parent=39 // pred_fallthru
          _
      $region40: #{tpu_custom_call.1} parent=5 // pred_fallthru
        _
      %p623 = scmp.le.s32.totalorder 2, %s17
      // Predicated region
      $region49: #{tpu_custom_call.1} parent=5 // pred_check
        %p624 = pneg %p623
      $region50: #{tpu_custom_call.1} parent=5 // pred_check_branch
        %626 = sbr.rel (%p624) target = $region52
      $region51: #{tpu_custom_call.1} parent=5 // pred_region
        %s627 = ssub.s32 %s17, 2
        // Predicated region
        $region53: #{tpu_custom_call.1} parent=51 // pred_check
          %p628 = pneg %p161
        $region54: #{tpu_custom_call.1} parent=51 // pred_check_branch
          %630 = sbr.rel (%p628) target = $region56
        $region55: #{tpu_custom_call.1} parent=51 // pred_region
          %s631 = sand.u32 %s146, 1
          %s632 = scalar_lea.sflag [#allocation4], %s631
          %s633 = sand.u32 %s146, 1
          %s634 = smul.addr %s633, 32
          %s635 = scalar_lea.vmem [#allocation5], %s634
          %637 = dma.done %s632, 512
        $region56: #{tpu_custom_call.1} parent=51 // pred_fallthru
          _
      $region52: #{tpu_custom_call.1} parent=5 // pred_fallthru
        _
    $region6: #{tpu_custom_call.1} parent=1 // loop_footer
      %s21 = sadd.s32 1, %s17
    $region7: #{tpu_custom_call.1} parent=1 // loop_footer_branch
      %16 = sbr.rel target = $region3
    $region8: #{tpu_custom_call.1} parent=1 // loop_exit
      _
    %638 = vsyncpa [#allocation3], 1
    %s639 = scalar_lea.sflag [#allocation3], 1
    %640 = vsyncpa %s639, 1
    %641 = vsyncpa [#allocation4], 1
    %s642 = scalar_lea.sflag [#allocation4], 1
    %643 = vsyncpa %s642, 1

</llo_original>
